<compile_context>
chip_gen: v5e
topology: v5e:2x2
jax: 0.10.0
libtpu: 0.0.40
codegen_flags: <defaults>
</compile_context>

<pallas_src>
import functools

import jax
import jax.numpy as jnp
from jax.experimental import pallas as pl
from jax.experimental.pallas import tpu as pltpu

LN_EPS = 1e-5          # nn.LayerNorm default
LRELU_SLOPE = 0.01     # F.leaky_relu default negative_slope
LANES = 128            # padded feature width (all hidden widths <= 128)


def _round_up(n, m):
    return ((n + m - 1) // m) * m


# -----------------------------------------------------------------------------
# Kernel
# -----------------------------------------------------------------------------
def _dqn_kernel(x_ref, w1_ref, wslab_ref, vec_ref, out_ref, *, widths, mask_rows):
    """One batch tile of the full 5-layer MLP.

    x_ref    : (TB, F_in)   f32   streamed activations tile
    w1_ref   : (F_in, 128)  bf16  layer-1 weight, out-dim zero-padded
    wslab_ref: (4, 128, 128)bf16  layers 2..5 weights, zero-padded
    vec_ref  : (16, 128)    f32   rows 0-4 biases b1..b5, 5-8 gammas g1..g4,
                                  9-12 betas be1..be4, 13.. lane masks
    out_ref  : (TB, OUT_PAD)f32   Q-values in lanes < num_out, rest zero
    widths   : static true hidden widths, e.g. (32., 64., 64., 32.)
    mask_rows: static row index in vec_ref of the lane mask for each hidden layer
    """
    x = x_ref[...].astype(jnp.float32)
    vecs = vec_ref[...]                                   # (16, 128) f32

    def ln_lrelu(z, width, g, be, mask):
        # z has exact zeros in padded lanes (padded weight cols + padded bias
        # are zero), so the lane sum over 128 equals the sum over `width`.
        inv_w = 1.0 / width
        mu = jnp.sum(z, axis=-1, keepdims=True) * inv_w          # XLU reduce
        zc = (z - mu) * mask                                     # padded lanes -> exact 0
        var = jnp.sum(zc * zc, axis=-1, keepdims=True) * inv_w   # two-pass variance
        zn = zc * jax.lax.rsqrt(var + LN_EPS)
        zn = zn * g + be                                         # padded gamma/beta = 0
        return jnp.maximum(zn, LRELU_SLOPE * zn)                 # LeakyReLU via max

    # Layer 1 (bf16 MXU matmul, f32 accumulate)
    z = (jnp.dot(x.astype(jnp.bfloat16), w1_ref[...],
                 preferred_element_type=jnp.float32) + vecs[0:1, :])
    h = ln_lrelu(z, widths[0], vecs[5:6, :], vecs[9:10, :],
                 vecs[mask_rows[0]:mask_rows[0] + 1, :])

    # Layers 2-4 (Linear -> LN -> LeakyReLU)
    for l in range(3):
        z = (jnp.dot(h.astype(jnp.bfloat16), wslab_ref[l],
                     preferred_element_type=jnp.float32) + vecs[1 + l:2 + l, :])
        h = ln_lrelu(z, widths[l + 1], vecs[6 + l:7 + l, :], vecs[10 + l:11 + l, :],
                     vecs[mask_rows[l + 1]:mask_rows[l + 1] + 1, :])

    # Output layer: plain Linear; store only the narrow (lane-padded) Q slab.
    q = (jnp.dot(h.astype(jnp.bfloat16), wslab_ref[3],
                 preferred_element_type=jnp.float32) + vecs[4:5, :])
    out_ref[...] = q[:, :out_ref.shape[1]].astype(out_ref.dtype)


# -----------------------------------------------------------------------------
# Parameter packing (do once, outside the hot loop)
# -----------------------------------------------------------------------------
def pack_dqn_params(params):
    """Flat 18-array param list -> (w1p, wslab, vecs, widths, mask_rows, num_out)."""
    (w1, b1, g1, be1, w2, b2, g2, be2,
     w3, b3, g3, be3, w4, b4, g4, be4, w5, b5) = params

    def pad_w(w):
        out = jnp.zeros((LANES, LANES), jnp.float32)
        return out.at[:w.shape[0], :w.shape[1]].set(w.astype(jnp.float32))

    def pad_v(v):
        v = v.reshape(-1).astype(jnp.float32)
        return jnp.zeros((LANES,), jnp.float32).at[:v.shape[0]].set(v)

    w1p = jnp.zeros((w1.shape[0], LANES), jnp.float32)
    w1p = w1p.at[:, :w1.shape[1]].set(w1.astype(jnp.float32))
    wslab = jnp.stack([pad_w(w2), pad_w(w3), pad_w(w4), pad_w(w5)])   # (4,128,128)

    widths = tuple(int(w.shape[1]) for w in (w1, w2, w3, w4))         # (32,64,64,32)

    # Lane masks for the (at most 3) distinct hidden widths, packed into rows 13..15.
    distinct = []
    for w in widths:
        if w not in distinct:
            distinct.append(w)
    assert len(distinct) <= 3, "too many distinct hidden widths for the vec slab"
    mask_row_of = {w: 13 + i for i, w in enumerate(distinct)}
    mask_rows = tuple(mask_row_of[w] for w in widths)

    rows = [pad_v(b1), pad_v(b2), pad_v(b3), pad_v(b4), pad_v(b5),
            pad_v(g1), pad_v(g2), pad_v(g3), pad_v(g4),
            pad_v(be1), pad_v(be2), pad_v(be3), pad_v(be4)]
    for i in range(3):
        if i < len(distinct):
            rows.append((jnp.arange(LANES) < distinct[i]).astype(jnp.float32))
        else:
            rows.append(jnp.zeros((LANES,), jnp.float32))
    vecs = jnp.stack(rows)                                            # (16,128) f32

    num_out = int(w5.shape[1])
    return (w1p.astype(jnp.bfloat16),          # bf16 MXU operands
            wslab.astype(jnp.bfloat16),
            vecs,                              # f32 biases/gammas/betas/masks
            tuple(float(w) for w in widths),
            mask_rows,
            num_out)


# -----------------------------------------------------------------------------
# Wrapper
# -----------------------------------------------------------------------------
def dqn_forward(x, packed, *, block_b=2048):
    """x: (B, num_in_features) float32; packed: output of pack_dqn_params."""
    w1p, wslab, vecs, widths, mask_rows, num_out = packed
    B, f_in = x.shape
    out_pad = _round_up(num_out, 8)

    # Tile selection: single exact step for B <= block_b; otherwise rebalance
    # the tile so padding waste is < 8 rows per grid step (no 640->1024 blowup).
    if B <= block_b:
        tb = _round_up(max(B, 1), 8)
    else:
        steps = pl.cdiv(B, block_b)
        tb = _round_up(-(-B // steps), 8)
    b_pad = _round_up(B, tb)
    if b_pad != B:
        x = jnp.pad(x, ((0, b_pad - B), (0, 0)))

    kernel = functools.partial(_dqn_kernel, widths=widths, mask_rows=mask_rows)

    out = pl.pallas_call(
        kernel,
        out_shape=jax.ShapeDtypeStruct((b_pad, out_pad), jnp.float32),
        grid=(b_pad // tb,),
        in_specs=[
            pl.BlockSpec((tb, f_in), lambda i: (i, 0)),              # streamed activations
            pl.BlockSpec((w1p.shape[0], LANES), lambda i: (0, 0)),   # resident params
            pl.BlockSpec((4, LANES, LANES), lambda i: (0, 0, 0)),
            pl.BlockSpec((16, LANES), lambda i: (0, 0)),
        ],
        out_specs=pl.BlockSpec((tb, out_pad), lambda i: (i, 0)),     # narrow Q-value store
        compiler_params=pltpu.CompilerParams(
            dimension_semantics=("parallel",),                       # megacore on v7x
            vmem_limit_bytes=32 * 1024 * 1024),                      # safe on v5e/v6e/v7x
    )(x, w1p, wslab, vecs)

    return out[:B, :num_out]


# -----------------------------------------------------------------------------
# Init + pure-JAX reference (for sanity checking)
# -----------------------------------------------------------------------------
def init_dqn_params(key, num_in_features, num_out_features):
    """Deterministic init mimicking PyTorch nn.Linear default U[-1/sqrt(fan_in), +]."""
    dims = [(num_in_features, 32), (32, 64), (64, 64), (64, 32),
            (32, num_out_features)]
    params = []
    keys = jax.random.split(key, len(dims) * 2)
    for i, (fan_in, fan_out) in enumerate(dims):
        bound = 1.0 / (fan_in ** 0.5)
        w = jax.random.uniform(keys[2 * i], (fan_in, fan_out),
                               minval=-bound, maxval=bound, dtype=jnp.float32)
        b = jax.random.uniform(keys[2 * i + 1], (1, fan_out),
                               minval=-bound, maxval=bound, dtype=jnp.float32)
        params.append(w)
        params.append(b)
        if i < 4:   # LayerNorm gamma=1, beta=0 after each hidden layer
            params.append(jnp.ones((1, fan_out), jnp.float32))
            params.append(jnp.zeros((1, fan_out), jnp.float32))
    return params   # [w1,b1,g1,be1, ..., w4,b4,g4,be4, w5,b5]


def dqn_reference(x, params):
    (w1, b1, g1, be1, w2, b2, g2, be2,
     w3, b3, g3, be3, w4, b4, g4, be4, w5, b5) = params

    def block(h, w, b, g, be):
        z = h @ w + b
        mu = jnp.mean(z, axis=-1, keepdims=True)
        var = jnp.mean(jnp.square(z - mu), axis=-1, keepdims=True)
        zn = (z - mu) / jnp.sqrt(var + LN_EPS) * g + be
        return jnp.where(zn >= 0, zn, LRELU_SLOPE * zn)

    h = block(x, w1, b1, g1, be1)
    h = block(h, w2, b2, g2, be2)
    h = block(h, w3, b3, g3, be3)
    h = block(h, w4, b4, g4, be4)
    return h @ w5 + b5


if __name__ == "__main__":
    num_in_features = 16
    num_out_features = 4

    key = jax.random.PRNGKey(0)
    k_x, k_p, k_x2 = jax.random.split(key, 3)

    params = init_dqn_params(k_p, num_in_features, num_out_features)
    packed = pack_dqn_params(params)

    # bf16 MXU operands -> ~1e-2 level differences vs the f32 reference.
    ATOL, RTOL = 5e-2, 5e-2

    # Small inference-style batch (single grid step, no padding copy).
    x_small = jax.random.normal(k_x, (8, num_in_features), dtype=jnp.float32)
    out_small = jax.block_until_ready(dqn_forward(x_small, packed))
    ref_small = dqn_reference(x_small, params)
    assert out_small.shape == (8, num_out_features)
    err_s = float(jnp.max(jnp.abs(out_small - ref_small)))
    assert jnp.allclose(out_small, ref_small, atol=ATOL, rtol=RTOL), \
        f"small-batch mismatch vs reference (max abs err {err_s})"

    # Replay-style batch. Default block_b -> single 640-row step (no pad);
    # forcing block_b=256 exercises the multi-step grid + minimal row padding.
    x_big = jax.random.normal(k_x2, (640, num_in_features), dtype=jnp.float32)
    ref_big = dqn_reference(x_big, params)

    out_big = jax.block_until_ready(dqn_forward(x_big, packed))
    assert out_big.shape == (640, num_out_features)
    err_b = float(jnp.max(jnp.abs(out_big - ref_big)))
    assert jnp.allclose(out_big, ref_big, atol=ATOL, rtol=RTOL), \
        f"large-batch mismatch vs reference (max abs err {err_b})"

    out_big_multi = jax.block_until_ready(dqn_forward(x_big, packed, block_b=256))
    err_m = float(jnp.max(jnp.abs(out_big_multi - ref_big)))
    assert jnp.allclose(out_big_multi, ref_big, atol=ATOL, rtol=RTOL), \
        f"multi-step grid mismatch vs reference (max abs err {err_m})"

    print("KERNEL_OK")
</pallas_src>

<mosaic_0001>
module attributes {stable_mosaic.version = 11 : i64} {
  func.func @_dqn_kernel(%arg0: i32, %arg1: memref<8x16xf32, #tpu.memory_space<vmem>>, %arg2: memref<16x128xbf16, #tpu.memory_space<vmem>>, %arg3: memref<4x128x128xbf16, #tpu.memory_space<vmem>>, %arg4: memref<16x128xf32, #tpu.memory_space<vmem>>, %arg5: memref<8x8xf32, #tpu.memory_space<vmem>>) attributes {dimension_semantics = [#tpu.dimension_semantics<parallel>], iteration_bounds = array<i64: 1>, scalar_prefetch = 0 : i64, scratch_operands = 0 : i64, tpu.core_type = #tpu.core_type<tc>, window_params = [{transform_indices = @transform_0, window_bounds = array<i64: 8, 16>}, {pipeline_mode = #tpu.pipeline_mode<synchronous>, transform_indices = @transform_1, window_bounds = array<i64: 16, 128>}, {pipeline_mode = #tpu.pipeline_mode<synchronous>, transform_indices = @transform_2, window_bounds = array<i64: 4, 128, 128>}, {pipeline_mode = #tpu.pipeline_mode<synchronous>, transform_indices = @transform_3, window_bounds = array<i64: 16, 128>}, {transform_indices = @transform_4, window_bounds = array<i64: 8, 8>}]} {
    %c0 = arith.constant 0 : index
    %c0_0 = arith.constant 0 : index
    %0 = vector.load %arg1[%c0, %c0_0] : memref<8x16xf32, #tpu.memory_space<vmem>>, vector<8x16xf32>
    %c0_1 = arith.constant 0 : index
    %c0_2 = arith.constant 0 : index
    %1 = vector.load %arg4[%c0_1, %c0_2] : memref<16x128xf32, #tpu.memory_space<vmem>>, vector<16x128xf32>
    %2 = arith.truncf %0 : vector<8x16xf32> to vector<8x16xbf16>
    %c0_3 = arith.constant 0 : index
    %c0_4 = arith.constant 0 : index
    %3 = vector.load %arg2[%c0_3, %c0_4] : memref<16x128xbf16, #tpu.memory_space<vmem>>, vector<16x128xbf16>
    %cst = arith.constant dense<0.000000e+00> : vector<8x128xf32>
    %4 = tpu.matmul %2, %3, %cst {dimension_numbers = #tpu.dot_dimension_numbers<[1], [0], [0], [1], [0, 0, 1, 1], [], []>} : vector<8x16xbf16>, vector<16x128xbf16>, vector<8x128xf32> -> vector<8x128xf32>
    %5 = vector.extract_strided_slice %1 {offsets = [0, 0], sizes = [1, 128], strides = [1, 1]} : vector<16x128xf32> to vector<1x128xf32>
    %6 = vector.broadcast %5 : vector<1x128xf32> to vector<8x128xf32>
    %7 = arith.addf %4, %6 : vector<8x128xf32>
    %8 = vector.extract_strided_slice %1 {offsets = [5, 0], sizes = [1, 128], strides = [1, 1]} : vector<16x128xf32> to vector<1x128xf32>
    %9 = vector.extract_strided_slice %1 {offsets = [9, 0], sizes = [1, 128], strides = [1, 1]} : vector<16x128xf32> to vector<1x128xf32>
    %10 = vector.extract_strided_slice %1 {offsets = [13, 0], sizes = [1, 128], strides = [1, 1]} : vector<16x128xf32> to vector<1x128xf32>
    %cst_5 = arith.constant dense<0.000000e+00> : vector<8xf32>
    %11 = vector.multi_reduction <add>, %7, %cst_5 [1] : vector<8x128xf32> to vector<8xf32>
    %12 = vector.shape_cast %11 : vector<8xf32> to vector<8x1xf32>
    %cst_6 = arith.constant 3.125000e-02 : f32
    %13 = vector.broadcast %cst_6 : f32 to vector<8x1xf32>
    %14 = arith.mulf %12, %13 : vector<8x1xf32>
    %15 = vector.broadcast %14 : vector<8x1xf32> to vector<8x128xf32>
    %16 = arith.subf %7, %15 : vector<8x128xf32>
    %17 = vector.broadcast %10 : vector<1x128xf32> to vector<8x128xf32>
    %18 = arith.mulf %16, %17 : vector<8x128xf32>
    %19 = arith.mulf %18, %18 : vector<8x128xf32>
    %cst_7 = arith.constant dense<0.000000e+00> : vector<8xf32>
    %20 = vector.multi_reduction <add>, %19, %cst_7 [1] : vector<8x128xf32> to vector<8xf32>
    %21 = vector.shape_cast %20 : vector<8xf32> to vector<8x1xf32>
    %cst_8 = arith.constant 3.125000e-02 : f32
    %22 = vector.broadcast %cst_8 : f32 to vector<8x1xf32>
    %23 = arith.mulf %21, %22 : vector<8x1xf32>
    %cst_9 = arith.constant 9.99999974E-6 : f32
    %24 = vector.broadcast %cst_9 : f32 to vector<8x1xf32>
    %25 = arith.addf %23, %24 : vector<8x1xf32>
    %26 = math.rsqrt %25 : vector<8x1xf32>
    %27 = vector.broadcast %26 : vector<8x1xf32> to vector<8x128xf32>
    %28 = arith.mulf %18, %27 : vector<8x128xf32>
    %29 = vector.broadcast %8 : vector<1x128xf32> to vector<8x128xf32>
    %30 = arith.mulf %28, %29 : vector<8x128xf32>
    %31 = vector.broadcast %9 : vector<1x128xf32> to vector<8x128xf32>
    %32 = arith.addf %30, %31 : vector<8x128xf32>
    %cst_10 = arith.constant 0.00999999977 : f32
    %33 = vector.broadcast %cst_10 : f32 to vector<8x128xf32>
    %34 = arith.mulf %33, %32 : vector<8x128xf32>
    %35 = arith.maximumf %32, %34 : vector<8x128xf32>
    %36 = arith.truncf %35 : vector<8x128xf32> to vector<8x128xbf16>
    %c0_11 = arith.constant 0 : index
    %c0_12 = arith.constant 0 : index
    %c0_13 = arith.constant 0 : index
    %37 = vector.load %arg3[%c0_11, %c0_12, %c0_13] : memref<4x128x128xbf16, #tpu.memory_space<vmem>>, vector<1x128x128xbf16>
    %38 = vector.shape_cast %37 : vector<1x128x128xbf16> to vector<128x128xbf16>
    %cst_14 = arith.constant dense<0.000000e+00> : vector<8x128xf32>
    %39 = tpu.matmul %36, %38, %cst_14 {dimension_numbers = #tpu.dot_dimension_numbers<[1], [0], [0], [1], [0, 0, 1, 1], [], []>} : vector<8x128xbf16>, vector<128x128xbf16>, vector<8x128xf32> -> vector<8x128xf32>
    %40 = vector.extract_strided_slice %1 {offsets = [1, 0], sizes = [1, 128], strides = [1, 1]} : vector<16x128xf32> to vector<1x128xf32>
    %41 = vector.broadcast %40 : vector<1x128xf32> to vector<8x128xf32>
    %42 = arith.addf %39, %41 : vector<8x128xf32>
    %43 = vector.extract_strided_slice %1 {offsets = [6, 0], sizes = [1, 128], strides = [1, 1]} : vector<16x128xf32> to vector<1x128xf32>
    %44 = vector.extract_strided_slice %1 {offsets = [10, 0], sizes = [1, 128], strides = [1, 1]} : vector<16x128xf32> to vector<1x128xf32>
    %45 = vector.extract_strided_slice %1 {offsets = [14, 0], sizes = [1, 128], strides = [1, 1]} : vector<16x128xf32> to vector<1x128xf32>
    %cst_15 = arith.constant dense<0.000000e+00> : vector<8xf32>
    %46 = vector.multi_reduction <add>, %42, %cst_15 [1] : vector<8x128xf32> to vector<8xf32>
    %47 = vector.shape_cast %46 : vector<8xf32> to vector<8x1xf32>
    %cst_16 = arith.constant 1.562500e-02 : f32
    %48 = vector.broadcast %cst_16 : f32 to vector<8x1xf32>
    %49 = arith.mulf %47, %48 : vector<8x1xf32>
    %50 = vector.broadcast %49 : vector<8x1xf32> to vector<8x128xf32>
    %51 = arith.subf %42, %50 : vector<8x128xf32>
    %52 = vector.broadcast %45 : vector<1x128xf32> to vector<8x128xf32>
    %53 = arith.mulf %51, %52 : vector<8x128xf32>
    %54 = arith.mulf %53, %53 : vector<8x128xf32>
    %cst_17 = arith.constant dense<0.000000e+00> : vector<8xf32>
    %55 = vector.multi_reduction <add>, %54, %cst_17 [1] : vector<8x128xf32> to vector<8xf32>
    %56 = vector.shape_cast %55 : vector<8xf32> to vector<8x1xf32>
    %cst_18 = arith.constant 1.562500e-02 : f32
    %57 = vector.broadcast %cst_18 : f32 to vector<8x1xf32>
    %58 = arith.mulf %56, %57 : vector<8x1xf32>
    %cst_19 = arith.constant 9.99999974E-6 : f32
    %59 = vector.broadcast %cst_19 : f32 to vector<8x1xf32>
    %60 = arith.addf %58, %59 : vector<8x1xf32>
    %61 = math.rsqrt %60 : vector<8x1xf32>
    %62 = vector.broadcast %61 : vector<8x1xf32> to vector<8x128xf32>
    %63 = arith.mulf %53, %62 : vector<8x128xf32>
    %64 = vector.broadcast %43 : vector<1x128xf32> to vector<8x128xf32>
    %65 = arith.mulf %63, %64 : vector<8x128xf32>
    %66 = vector.broadcast %44 : vector<1x128xf32> to vector<8x128xf32>
    %67 = arith.addf %65, %66 : vector<8x128xf32>
    %cst_20 = arith.constant 0.00999999977 : f32
    %68 = vector.broadcast %cst_20 : f32 to vector<8x128xf32>
    %69 = arith.mulf %68, %67 : vector<8x128xf32>
    %70 = arith.maximumf %67, %69 : vector<8x128xf32>
    %71 = arith.truncf %70 : vector<8x128xf32> to vector<8x128xbf16>
    %c1 = arith.constant 1 : index
    %c0_21 = arith.constant 0 : index
    %c0_22 = arith.constant 0 : index
    %72 = vector.load %arg3[%c1, %c0_21, %c0_22] : memref<4x128x128xbf16, #tpu.memory_space<vmem>>, vector<1x128x128xbf16>
    %73 = vector.shape_cast %72 : vector<1x128x128xbf16> to vector<128x128xbf16>
    %cst_23 = arith.constant dense<0.000000e+00> : vector<8x128xf32>
    %74 = tpu.matmul %71, %73, %cst_23 {dimension_numbers = #tpu.dot_dimension_numbers<[1], [0], [0], [1], [0, 0, 1, 1], [], []>} : vector<8x128xbf16>, vector<128x128xbf16>, vector<8x128xf32> -> vector<8x128xf32>
    %75 = vector.extract_strided_slice %1 {offsets = [2, 0], sizes = [1, 128], strides = [1, 1]} : vector<16x128xf32> to vector<1x128xf32>
    %76 = vector.broadcast %75 : vector<1x128xf32> to vector<8x128xf32>
    %77 = arith.addf %74, %76 : vector<8x128xf32>
    %78 = vector.extract_strided_slice %1 {offsets = [7, 0], sizes = [1, 128], strides = [1, 1]} : vector<16x128xf32> to vector<1x128xf32>
    %79 = vector.extract_strided_slice %1 {offsets = [11, 0], sizes = [1, 128], strides = [1, 1]} : vector<16x128xf32> to vector<1x128xf32>
    %80 = vector.extract_strided_slice %1 {offsets = [14, 0], sizes = [1, 128], strides = [1, 1]} : vector<16x128xf32> to vector<1x128xf32>
    %cst_24 = arith.constant dense<0.000000e+00> : vector<8xf32>
    %81 = vector.multi_reduction <add>, %77, %cst_24 [1] : vector<8x128xf32> to vector<8xf32>
    %82 = vector.shape_cast %81 : vector<8xf32> to vector<8x1xf32>
    %cst_25 = arith.constant 1.562500e-02 : f32
    %83 = vector.broadcast %cst_25 : f32 to vector<8x1xf32>
    %84 = arith.mulf %82, %83 : vector<8x1xf32>
    %85 = vector.broadcast %84 : vector<8x1xf32> to vector<8x128xf32>
    %86 = arith.subf %77, %85 : vector<8x128xf32>
    %87 = vector.broadcast %80 : vector<1x128xf32> to vector<8x128xf32>
    %88 = arith.mulf %86, %87 : vector<8x128xf32>
    %89 = arith.mulf %88, %88 : vector<8x128xf32>
    %cst_26 = arith.constant dense<0.000000e+00> : vector<8xf32>
    %90 = vector.multi_reduction <add>, %89, %cst_26 [1] : vector<8x128xf32> to vector<8xf32>
    %91 = vector.shape_cast %90 : vector<8xf32> to vector<8x1xf32>
    %cst_27 = arith.constant 1.562500e-02 : f32
    %92 = vector.broadcast %cst_27 : f32 to vector<8x1xf32>
    %93 = arith.mulf %91, %92 : vector<8x1xf32>
    %cst_28 = arith.constant 9.99999974E-6 : f32
    %94 = vector.broadcast %cst_28 : f32 to vector<8x1xf32>
    %95 = arith.addf %93, %94 : vector<8x1xf32>
    %96 = math.rsqrt %95 : vector<8x1xf32>
    %97 = vector.broadcast %96 : vector<8x1xf32> to vector<8x128xf32>
    %98 = arith.mulf %88, %97 : vector<8x128xf32>
    %99 = vector.broadcast %78 : vector<1x128xf32> to vector<8x128xf32>
    %100 = arith.mulf %98, %99 : vector<8x128xf32>
    %101 = vector.broadcast %79 : vector<1x128xf32> to vector<8x128xf32>
    %102 = arith.addf %100, %101 : vector<8x128xf32>
    %cst_29 = arith.constant 0.00999999977 : f32
    %103 = vector.broadcast %cst_29 : f32 to vector<8x128xf32>
    %104 = arith.mulf %103, %102 : vector<8x128xf32>
    %105 = arith.maximumf %102, %104 : vector<8x128xf32>
    %106 = arith.truncf %105 : vector<8x128xf32> to vector<8x128xbf16>
    %c2 = arith.constant 2 : index
    %c0_30 = arith.constant 0 : index
    %c0_31 = arith.constant 0 : index
    %107 = vector.load %arg3[%c2, %c0_30, %c0_31] : memref<4x128x128xbf16, #tpu.memory_space<vmem>>, vector<1x128x128xbf16>
    %108 = vector.shape_cast %107 : vector<1x128x128xbf16> to vector<128x128xbf16>
    %cst_32 = arith.constant dense<0.000000e+00> : vector<8x128xf32>
    %109 = tpu.matmul %106, %108, %cst_32 {dimension_numbers = #tpu.dot_dimension_numbers<[1], [0], [0], [1], [0, 0, 1, 1], [], []>} : vector<8x128xbf16>, vector<128x128xbf16>, vector<8x128xf32> -> vector<8x128xf32>
    %110 = vector.extract_strided_slice %1 {offsets = [3, 0], sizes = [1, 128], strides = [1, 1]} : vector<16x128xf32> to vector<1x128xf32>
    %111 = vector.broadcast %110 : vector<1x128xf32> to vector<8x128xf32>
    %112 = arith.addf %109, %111 : vector<8x128xf32>
    %113 = vector.extract_strided_slice %1 {offsets = [8, 0], sizes = [1, 128], strides = [1, 1]} : vector<16x128xf32> to vector<1x128xf32>
    %114 = vector.extract_strided_slice %1 {offsets = [12, 0], sizes = [1, 128], strides = [1, 1]} : vector<16x128xf32> to vector<1x128xf32>
    %115 = vector.extract_strided_slice %1 {offsets = [13, 0], sizes = [1, 128], strides = [1, 1]} : vector<16x128xf32> to vector<1x128xf32>
    %cst_33 = arith.constant dense<0.000000e+00> : vector<8xf32>
    %116 = vector.multi_reduction <add>, %112, %cst_33 [1] : vector<8x128xf32> to vector<8xf32>
    %117 = vector.shape_cast %116 : vector<8xf32> to vector<8x1xf32>
    %cst_34 = arith.constant 3.125000e-02 : f32
    %118 = vector.broadcast %cst_34 : f32 to vector<8x1xf32>
    %119 = arith.mulf %117, %118 : vector<8x1xf32>
    %120 = vector.broadcast %119 : vector<8x1xf32> to vector<8x128xf32>
    %121 = arith.subf %112, %120 : vector<8x128xf32>
    %122 = vector.broadcast %115 : vector<1x128xf32> to vector<8x128xf32>
    %123 = arith.mulf %121, %122 : vector<8x128xf32>
    %124 = arith.mulf %123, %123 : vector<8x128xf32>
    %cst_35 = arith.constant dense<0.000000e+00> : vector<8xf32>
    %125 = vector.multi_reduction <add>, %124, %cst_35 [1] : vector<8x128xf32> to vector<8xf32>
    %126 = vector.shape_cast %125 : vector<8xf32> to vector<8x1xf32>
    %cst_36 = arith.constant 3.125000e-02 : f32
    %127 = vector.broadcast %cst_36 : f32 to vector<8x1xf32>
    %128 = arith.mulf %126, %127 : vector<8x1xf32>
    %cst_37 = arith.constant 9.99999974E-6 : f32
    %129 = vector.broadcast %cst_37 : f32 to vector<8x1xf32>
    %130 = arith.addf %128, %129 : vector<8x1xf32>
    %131 = math.rsqrt %130 : vector<8x1xf32>
    %132 = vector.broadcast %131 : vector<8x1xf32> to vector<8x128xf32>
    %133 = arith.mulf %123, %132 : vector<8x128xf32>
    %134 = vector.broadcast %113 : vector<1x128xf32> to vector<8x128xf32>
    %135 = arith.mulf %133, %134 : vector<8x128xf32>
    %136 = vector.broadcast %114 : vector<1x128xf32> to vector<8x128xf32>
    %137 = arith.addf %135, %136 : vector<8x128xf32>
    %cst_38 = arith.constant 0.00999999977 : f32
    %138 = vector.broadcast %cst_38 : f32 to vector<8x128xf32>
    %139 = arith.mulf %138, %137 : vector<8x128xf32>
    %140 = arith.maximumf %137, %139 : vector<8x128xf32>
    %141 = arith.truncf %140 : vector<8x128xf32> to vector<8x128xbf16>
    %c3 = arith.constant 3 : index
    %c0_39 = arith.constant 0 : index
    %c0_40 = arith.constant 0 : index
    %142 = vector.load %arg3[%c3, %c0_39, %c0_40] : memref<4x128x128xbf16, #tpu.memory_space<vmem>>, vector<1x128x128xbf16>
    %143 = vector.shape_cast %142 : vector<1x128x128xbf16> to vector<128x128xbf16>
    %cst_41 = arith.constant dense<0.000000e+00> : vector<8x128xf32>
    %144 = tpu.matmul %141, %143, %cst_41 {dimension_numbers = #tpu.dot_dimension_numbers<[1], [0], [0], [1], [0, 0, 1, 1], [], []>} : vector<8x128xbf16>, vector<128x128xbf16>, vector<8x128xf32> -> vector<8x128xf32>
    %145 = vector.extract_strided_slice %1 {offsets = [4, 0], sizes = [1, 128], strides = [1, 1]} : vector<16x128xf32> to vector<1x128xf32>
    %146 = vector.broadcast %145 : vector<1x128xf32> to vector<8x128xf32>
    %147 = arith.addf %144, %146 : vector<8x128xf32>
    %148 = vector.extract_strided_slice %147 {offsets = [0, 0], sizes = [8, 8], strides = [1, 1]} : vector<8x128xf32> to vector<8x8xf32>
    %c0_42 = arith.constant 0 : index
    %c0_43 = arith.constant 0 : index
    %149 = vector.load %arg5[%c0_42, %c0_43] : memref<8x8xf32, #tpu.memory_space<vmem>>, vector<8x8xf32>
    tpu.vector_store %arg5[%c0_42, %c0_43], %148 {strides = array<i32>} : memref<8x8xf32, #tpu.memory_space<vmem>>, vector<8x8xf32>,
    return
  }
  func.func @transform_0(%arg0: i32) -> (i32, i32) {
    %c0_i32 = arith.constant 0 : i32
    %c0_i32_0 = arith.constant 0 : i32
    return %arg0, %c0_i32 : i32, i32
  }
  func.func @transform_1(%arg0: i32) -> (i32, i32) {
    %c0_i32 = arith.constant 0 : i32
    %c0_i32_0 = arith.constant 0 : i32
    %c0_i32_1 = arith.constant 0 : i32
    return %c0_i32, %c0_i32_0 : i32, i32
  }
  func.func @transform_2(%arg0: i32) -> (i32, i32, i32) {
    %c0_i32 = arith.constant 0 : i32
    %c0_i32_0 = arith.constant 0 : i32
    %c0_i32_1 = arith.constant 0 : i32
    %c0_i32_2 = arith.constant 0 : i32
    return %c0_i32, %c0_i32_0, %c0_i32_1 : i32, i32, i32
  }
  func.func @transform_3(%arg0: i32) -> (i32, i32) {
    %c0_i32 = arith.constant 0 : i32
    %c0_i32_0 = arith.constant 0 : i32
    %c0_i32_1 = arith.constant 0 : i32
    return %c0_i32, %c0_i32_0 : i32, i32
  }
  func.func @transform_4(%arg0: i32) -> (i32, i32) {
    %c0_i32 = arith.constant 0 : i32
    %c0_i32_0 = arith.constant 0 : i32
    return %arg0, %c0_i32 : i32, i32
  }
}

</mosaic_0001>

<llo_original>
// kernel: tpu_custom_call.1
$region0: #{tpu_custom_call.1}
  #allocation0 [shape = 'u32[]', space=smem, size = 0x4, offset = 0x4, fixed_abs, tag = 'smem constant byte address 0x4 - core index']
  #allocation1 [shape = 'u32[72,128]{1,0:T(1,128)}', space=vmem, size = 0x9000, scoped, tag = 'internal scratch']
  %s0 = inlined_call_operand.hbm [shape: f32[8,16], index: 0, kind: input, shape index: {}]
  %s1 = inlined_call_operand.hbm [shape: bf16[16,128], index: 1, kind: input, shape index: {}]
  %s2 = inlined_call_operand.hbm [shape: bf16[4,128,128], index: 2, kind: input, shape index: {}]
  %s3 = inlined_call_operand.hbm [shape: f32[16,128], index: 3, kind: input, shape index: {}]
  %s4 = inlined_call_operand.hbm [shape: f32[8,8], index: 4, kind: output, shape index: {}]
  %s5 = sld [smem:[#allocation0]]
  $region42: #{tpu_custom_call.1} parent=0
    _
  %s7 = ssub.s32 1, %s5
  %s8 = scalar_select 0, %s7, %s5
  $region1: #{tpu_custom_call.1} parent=0
    #allocation2 [shape = 'u8[4096]{0}', space=vmem, size = 0x1000, scoped, tag = 'input window, operand 0, single buffered']
    #allocation3 [shape = 's32[1]{0}', space=sflag, size = 0x4, scoped, tag = 'scoped memory for tpu_custom_call.1']
    #allocation4 [shape = 's32[1]{0}', space=sflag, size = 0x4, scoped, tag = 'scoped memory for tpu_custom_call.1']
    #allocation5 [shape = 'u8[4096]{0}', space=vmem, size = 0x1000, scoped, tag = 'input window, operand 1, single buffered']
    #allocation6 [shape = 's32[1]{0}', space=sflag, size = 0x4, scoped, tag = 'scoped memory for tpu_custom_call.1']
    #allocation7 [shape = 'u8[131072]{0}', space=vmem, size = 0x20000, scoped, tag = 'input window, operand 2, single buffered']
    #allocation8 [shape = 'u8[8192]{0}', space=vmem, size = 0x2000, scoped, tag = 'input window, operand 3, single buffered']
    #allocation9 [shape = 's32[1]{0}', space=sflag, size = 0x4, scoped, tag = 'scoped memory for tpu_custom_call.1']
    #allocation10 [shape = 'u8[4096]{0}', space=vmem, size = 0x1000, scoped, tag = 'output window, operand 0, single buffered']
    %9 = vsyncpa [#allocation3], 0
    %10 = vsyncpa [#allocation6], 0
    %11 = vsyncpa [#allocation9], 0
    %12 = vsyncpa [#allocation4], 0
    // Predicated region
    $region2: #{tpu_custom_call.1} parent=1 // pred_check
      _
    $region3: #{tpu_custom_call.1} parent=1 // pred_check_branch
      %14 = sbr.rel (0) target = $region5
    $region4: #{tpu_custom_call.1} parent=1 // pred_region
      %16 = vsyncadd [#allocation3], 0
      %s18 = sshll.u32 %s0, 4
      %s19 = int_to_ptr.hbm [resolvable:$true] %s18
      %s20 = sshll.u32 [#allocation2], 4
      %s21 = int_to_ptr.vmem [resolvable:$true] %s20
      %23 = dma.hbm_to_vmem [thread:$0]  %s19, 128, %s21, [#allocation3]
    $region5: #{tpu_custom_call.1} parent=1 // pred_fallthru
      _
    // Predicated region
    $region6: #{tpu_custom_call.1} parent=1 // pred_check
      _
    $region7: #{tpu_custom_call.1} parent=1 // pred_check_branch
      %25 = sbr.rel (0) target = $region9
    $region8: #{tpu_custom_call.1} parent=1 // pred_region
      %27 = vsyncadd [#allocation6], 0
      %s28 = sshll.u32 %s1, 4
      %s29 = int_to_ptr.hbm [resolvable:$true] %s28
      %s30 = sshll.u32 [#allocation5], 4
      %s31 = int_to_ptr.vmem [resolvable:$true] %s30
      %36 = dma.hbm_to_vmem [thread:$0]  %s29, 128, %s31, [#allocation6], 64, 64, 4
    $region9: #{tpu_custom_call.1} parent=1 // pred_fallthru
      _
    // Predicated region
    $region10: #{tpu_custom_call.1} parent=1 // pred_check
      _
    $region11: #{tpu_custom_call.1} parent=1 // pred_check_branch
      %38 = sbr.rel (0) target = $region13
    $region12: #{tpu_custom_call.1} parent=1 // pred_region
      %40 = vsyncadd [#allocation6], 0
      %s41 = sshll.u32 %s2, 4
      %s42 = int_to_ptr.hbm [resolvable:$true] %s41
      %s43 = sshll.u32 [#allocation7], 4
      %s44 = int_to_ptr.vmem [resolvable:$true] %s43
      %49 = dma.hbm_to_vmem [thread:$0]  %s42, 4096, %s44, [#allocation6], 64, 64, 4
    $region13: #{tpu_custom_call.1} parent=1 // pred_fallthru
      _
    // Predicated region
    $region14: #{tpu_custom_call.1} parent=1 // pred_check
      _
    $region15: #{tpu_custom_call.1} parent=1 // pred_check_branch
      %51 = sbr.rel (0) target = $region17
    $region16: #{tpu_custom_call.1} parent=1 // pred_region
      %53 = vsyncadd [#allocation9], 0
      %s54 = sshll.u32 %s3, 4
      %s55 = int_to_ptr.hbm [resolvable:$true] %s54
      %s56 = sshll.u32 [#allocation8], 4
      %s57 = int_to_ptr.vmem [resolvable:$true] %s56
      %62 = dma.hbm_to_vmem [thread:$0]  %s55, 256, %s57, [#allocation9], 128, 128, 8
    $region17: #{tpu_custom_call.1} parent=1 // pred_fallthru
      _
    // Predicated region
    $region18: #{tpu_custom_call.1} parent=1 // pred_check
      _
    $region19: #{tpu_custom_call.1} parent=1 // pred_check_branch
      %64 = sbr.rel (0) target = $region21
    $region20: #{tpu_custom_call.1} parent=1 // pred_region
      %66 = dma.done [#allocation3], 128
    $region21: #{tpu_custom_call.1} parent=1 // pred_fallthru
      _
    // Predicated region
    $region22: #{tpu_custom_call.1} parent=1 // pred_check
      _
    $region23: #{tpu_custom_call.1} parent=1 // pred_check_branch
      %68 = sbr.rel (0) target = $region25
    $region24: #{tpu_custom_call.1} parent=1 // pred_region
      %70 = dma.done [#allocation6], 128
    $region25: #{tpu_custom_call.1} parent=1 // pred_fallthru
      _
    // Predicated region
    $region26: #{tpu_custom_call.1} parent=1 // pred_check
      _
    $region27: #{tpu_custom_call.1} parent=1 // pred_check_branch
      %72 = sbr.rel (0) target = $region29
    $region28: #{tpu_custom_call.1} parent=1 // pred_region
      %74 = dma.done [#allocation6], 4096
    $region29: #{tpu_custom_call.1} parent=1 // pred_fallthru
      _
    // Predicated region
    $region30: #{tpu_custom_call.1} parent=1 // pred_check
      _
    $region31: #{tpu_custom_call.1} parent=1 // pred_check_branch
      %76 = sbr.rel (0) target = $region33
    $region32: #{tpu_custom_call.1} parent=1 // pred_region
      %78 = dma.done [#allocation9], 256
    $region33: #{tpu_custom_call.1} parent=1 // pred_fallthru
      _
    %v80 = vld [vmem:[#allocation2] sm:$0xff]
    %v81 = vld [vmem:[#allocation8] sm:$0xff]
    %v82 = vld [vmem:[#allocation8 + $0x8] sm:$0xff]
    %v83 = vpack.c.bf16 %v80, %v80
    %v84 = vld [vmem:[#allocation5] sm:$0xf]
    %v85 = vld [vmem:[#allocation5 + $0x4] sm:$0xf]
    %v86 = vperm.slane %v81, 0
    %v89 = vunpack.c.l.b16 %v84
    %v90 = vunpack.c.l.b16 %v85
    %v91 = vpack.c.b16 %v90, %v89
    %vm93 = vcmask 130048
    %v95 = vsel %vm93, %v83, 0
    %97 = vmatpush.bf16.msra.mxu0 0
    %98 = vmatpush.bf16.msra.mxu0 0
    %99 = vmatpush.bf16.msra.mxu0 0
    %100 = vmatpush.bf16.msra.mxu0 0
    %101 = vmatpush.bf16.msra.mxu0 0
    %102 = vmatpush.bf16.msra.mxu0 0
    %103 = vmatpush.bf16.msra.mxu0 0
    %104 = vmatpush.bf16.msra.mxu0 %v91
    %105 = vmatmul.bf16.gmra.mxu0 %v95
    %v106 = vpop.f32.mrf.mxu0
    %v107 = vadd.f32 %v86, %v106
    %v108 = vpop.f32.mrf.mxu0
    %109 = vdwg.mxu0
    %110 = vadd.xlane.f32.xlu0 %v107
    %v111 = vpop.xlane.xlu0 %110
    %v112 = vmul.f32 %v111, 0.03125
    %v113 = vsub.f32 %v107, %v112
    %v114 = vperm.slane %v82, 5
    %v115 = vmul.f32 %v113, %v114
    %v116 = vmul.f32 %v115, %v115
    %117 = vadd.xlane.f32.xlu0 %v116
    %v118 = vpop.xlane.xlu0 %117
    %v119 = vmul.f32 %v118, 0.03125
    %v120 = vadd.f32 %v119, 1e-05
    %v121 = vrsqrt.pop %v120
    %v122 = vmul.f32 %v121, %v120
    %v123 = vmul.f32 %v122, %v121
    %v124 = vmul.f32 0.5, %v123
    %v125 = vsub.f32 1.5, %v124
    %v126 = vmul.f32 %v121, %v125
    %vm127 = vweird.f32 %v120
    %vm128 = vweird.f32 %v121
    %vm129 = vmor %vm127, %vm128
    %v130 = vsel %vm129, %v121, %v126
    %v131 = vmul.f32 %v115, %v130
    %v132 = vperm.slane %v81, 5
    %v133 = vmul.f32 %v131, %v132
    %v134 = vperm.slane %v82, 1
    %v135 = vadd.f32 %v133, %v134
    %v136 = vmul.f32 %v135, 0.01
    %v137 = vmax.f32 %v135, %v136
    %v138 = vpack.c.bf16 %v137, %v137
    %v139 = vld [vmem:[#allocation7] sm:$0xf]
    %v140 = vld [vmem:[#allocation7 + $0x4] sm:$0xf]
    %v141 = vld [vmem:[#allocation7 + $0x8] sm:$0xf]
    %v142 = vld [vmem:[#allocation7 + $0xc] sm:$0xf]
    %v143 = vld [vmem:[#allocation7 + $0x10] sm:$0xf]
    %v144 = vld [vmem:[#allocation7 + $0x14] sm:$0xf]
    %v145 = vld [vmem:[#allocation7 + $0x18] sm:$0xf]
    %v146 = vld [vmem:[#allocation7 + $0x1c] sm:$0xf]
    %v147 = vld [vmem:[#allocation7 + $0x20] sm:$0xf]
    %v148 = vld [vmem:[#allocation7 + $0x24] sm:$0xf]
    %v149 = vld [vmem:[#allocation7 + $0x28] sm:$0xf]
    %v150 = vld [vmem:[#allocation7 + $0x2c] sm:$0xf]
    %v151 = vld [vmem:[#allocation7 + $0x30] sm:$0xf]
    %v152 = vld [vmem:[#allocation7 + $0x34] sm:$0xf]
    %v153 = vld [vmem:[#allocation7 + $0x38] sm:$0xf]
    %v154 = vld [vmem:[#allocation7 + $0x3c] sm:$0xf]
    %v155 = vperm.slane %v81, 1
    %v172 = vunpack.c.l.b16 %v139
    %v173 = vunpack.c.l.b16 %v140
    %v174 = vunpack.c.l.b16 %v141
    %v175 = vunpack.c.l.b16 %v142
    %v176 = vunpack.c.l.b16 %v143
    %v177 = vunpack.c.l.b16 %v144
    %v178 = vunpack.c.l.b16 %v145
    %v179 = vunpack.c.l.b16 %v146
    %v180 = vunpack.c.l.b16 %v147
    %v181 = vunpack.c.l.b16 %v148
    %v182 = vunpack.c.l.b16 %v149
    %v183 = vunpack.c.l.b16 %v150
    %v184 = vunpack.c.l.b16 %v151
    %v185 = vunpack.c.l.b16 %v152
    %v186 = vunpack.c.l.b16 %v153
    %v187 = vunpack.c.l.b16 %v154
    %v188 = vpack.c.b16 %v173, %v172
    %v189 = vpack.c.b16 %v175, %v174
    %v190 = vpack.c.b16 %v177, %v176
    %v191 = vpack.c.b16 %v179, %v178
    %v192 = vpack.c.b16 %v181, %v180
    %v193 = vpack.c.b16 %v183, %v182
    %v194 = vpack.c.b16 %v185, %v184
    %v195 = vpack.c.b16 %v187, %v186
    %204 = vmatpush.bf16.msra.mxu0 %v195
    %205 = vmatpush.bf16.msra.mxu0 %v194
    %206 = vmatpush.bf16.msra.mxu0 %v193
    %207 = vmatpush.bf16.msra.mxu0 %v192
    %208 = vmatpush.bf16.msra.mxu0 %v191
    %209 = vmatpush.bf16.msra.mxu0 %v190
    %210 = vmatpush.bf16.msra.mxu0 %v189
    %211 = vmatpush.bf16.msra.mxu0 %v188
    %212 = vmatmul.bf16.gmra.mxu0 %v138
    %v213 = vpop.f32.mrf.mxu0
    %v214 = vadd.f32 %v155, %v213
    %v215 = vpop.f32.mrf.mxu0
    %216 = vdwg.mxu0
    %217 = vadd.xlane.f32.xlu0 %v214
    %v218 = vpop.xlane.xlu0 %217
    %v219 = vmul.f32 %v218, 0.015625
    %v220 = vsub.f32 %v214, %v219
    %v221 = vperm.slane %v82, 6
    %v222 = vmul.f32 %v220, %v221
    %v223 = vmul.f32 %v222, %v222
    %224 = vadd.xlane.f32.xlu0 %v223
    %v225 = vpop.xlane.xlu0 %224
    %v226 = vmul.f32 %v225, 0.015625
    %v227 = vadd.f32 %v226, 1e-05
    %v228 = vrsqrt.pop %v227
    %v229 = vmul.f32 %v228, %v227
    %v230 = vmul.f32 %v229, %v228
    %v231 = vmul.f32 0.5, %v230
    %v232 = vsub.f32 1.5, %v231
    %v233 = vmul.f32 %v228, %v232
    %vm234 = vweird.f32 %v227
    %vm235 = vweird.f32 %v228
    %vm236 = vmor %vm234, %vm235
    %v237 = vsel %vm236, %v228, %v233
    %v238 = vmul.f32 %v222, %v237
    %v239 = vperm.slane %v81, 6
    %v240 = vmul.f32 %v238, %v239
    %v241 = vperm.slane %v82, 2
    %v242 = vadd.f32 %v240, %v241
    %v243 = vmul.f32 %v242, 0.01
    %v244 = vmax.f32 %v242, %v243
    %v245 = vpack.c.bf16 %v244, %v244
    %s246 = scalar_lea.vmem [#allocation7], 64
    %v247 = vld [vmem:[%s246] sm:$0xf]
    %v248 = vld [vmem:[%s246 + $0x4] sm:$0xf]
    %v249 = vld [vmem:[%s246 + $0x8] sm:$0xf]
    %v250 = vld [vmem:[%s246 + $0xc] sm:$0xf]
    %v251 = vld [vmem:[%s246 + $0x10] sm:$0xf]
    %v252 = vld [vmem:[%s246 + $0x14] sm:$0xf]
    %v253 = vld [vmem:[%s246 + $0x18] sm:$0xf]
    %v254 = vld [vmem:[%s246 + $0x1c] sm:$0xf]
    %v255 = vld [vmem:[%s246 + $0x20] sm:$0xf]
    %v256 = vld [vmem:[%s246 + $0x24] sm:$0xf]
    %v257 = vld [vmem:[%s246 + $0x28] sm:$0xf]
    %v258 = vld [vmem:[%s246 + $0x2c] sm:$0xf]
    %v259 = vld [vmem:[%s246 + $0x30] sm:$0xf]
    %v260 = vld [vmem:[%s246 + $0x34] sm:$0xf]
    %v261 = vld [vmem:[%s246 + $0x38] sm:$0xf]
    %v262 = vld [vmem:[%s246 + $0x3c] sm:$0xf]
    %v263 = vperm.slane %v81, 2
    %v280 = vunpack.c.l.b16 %v247
    %v281 = vunpack.c.l.b16 %v248
    %v282 = vunpack.c.l.b16 %v249
    %v283 = vunpack.c.l.b16 %v250
    %v284 = vunpack.c.l.b16 %v251
    %v285 = vunpack.c.l.b16 %v252
    %v286 = vunpack.c.l.b16 %v253
    %v287 = vunpack.c.l.b16 %v254
    %v288 = vunpack.c.l.b16 %v255
    %v289 = vunpack.c.l.b16 %v256
    %v290 = vunpack.c.l.b16 %v257
    %v291 = vunpack.c.l.b16 %v258
    %v292 = vunpack.c.l.b16 %v259
    %v293 = vunpack.c.l.b16 %v260
    %v294 = vunpack.c.l.b16 %v261
    %v295 = vunpack.c.l.b16 %v262
    %v296 = vpack.c.b16 %v281, %v280
    %v297 = vpack.c.b16 %v283, %v282
    %v298 = vpack.c.b16 %v285, %v284
    %v299 = vpack.c.b16 %v287, %v286
    %v300 = vpack.c.b16 %v289, %v288
    %v301 = vpack.c.b16 %v291, %v290
    %v302 = vpack.c.b16 %v293, %v292
    %v303 = vpack.c.b16 %v295, %v294
    %312 = vmatpush.bf16.msra.mxu0 %v303
    %313 = vmatpush.bf16.msra.mxu0 %v302
    %314 = vmatpush.bf16.msra.mxu0 %v301
    %315 = vmatpush.bf16.msra.mxu0 %v300
    %316 = vmatpush.bf16.msra.mxu0 %v299
    %317 = vmatpush.bf16.msra.mxu0 %v298
    %318 = vmatpush.bf16.msra.mxu0 %v297
    %319 = vmatpush.bf16.msra.mxu0 %v296
    %320 = vmatmul.bf16.gmra.mxu0 %v245
    %v321 = vpop.f32.mrf.mxu0
    %v322 = vadd.f32 %v263, %v321
    %v323 = vpop.f32.mrf.mxu0
    %324 = vdwg.mxu0
    %325 = vadd.xlane.f32.xlu0 %v322
    %v326 = vpop.xlane.xlu0 %325
    %v327 = vmul.f32 %v326, 0.015625
    %v328 = vsub.f32 %v322, %v327
    %v329 = vmul.f32 %v328, %v221
    %v330 = vmul.f32 %v329, %v329
    %331 = vadd.xlane.f32.xlu0 %v330
    %v332 = vpop.xlane.xlu0 %331
    %v333 = vmul.f32 %v332, 0.015625
    %v334 = vadd.f32 %v333, 1e-05
    %v335 = vrsqrt.pop %v334
    %v336 = vmul.f32 %v335, %v334
    %v337 = vmul.f32 %v336, %v335
    %v338 = vmul.f32 0.5, %v337
    %v339 = vsub.f32 1.5, %v338
    %v340 = vmul.f32 %v335, %v339
    %vm341 = vweird.f32 %v334
    %vm342 = vweird.f32 %v335
    %vm343 = vmor %vm341, %vm342
    %v344 = vsel %vm343, %v335, %v340
    %v345 = vmul.f32 %v329, %v344
    %v346 = vperm.slane %v81, 7
    %v347 = vmul.f32 %v345, %v346
    %v348 = vperm.slane %v82, 3
    %v349 = vadd.f32 %v347, %v348
    %v350 = vmul.f32 %v349, 0.01
    %v351 = vmax.f32 %v349, %v350
    %v352 = vpack.c.bf16 %v351, %v351
    %s353 = scalar_lea.vmem [#allocation7], 128
    %v354 = vld [vmem:[%s353] sm:$0xf]
    %v355 = vld [vmem:[%s353 + $0x4] sm:$0xf]
    %v356 = vld [vmem:[%s353 + $0x8] sm:$0xf]
    %v357 = vld [vmem:[%s353 + $0xc] sm:$0xf]
    %v358 = vld [vmem:[%s353 + $0x10] sm:$0xf]
    %v359 = vld [vmem:[%s353 + $0x14] sm:$0xf]
    %v360 = vld [vmem:[%s353 + $0x18] sm:$0xf]
    %v361 = vld [vmem:[%s353 + $0x1c] sm:$0xf]
    %v362 = vld [vmem:[%s353 + $0x20] sm:$0xf]
    %v363 = vld [vmem:[%s353 + $0x24] sm:$0xf]
    %v364 = vld [vmem:[%s353 + $0x28] sm:$0xf]
    %v365 = vld [vmem:[%s353 + $0x2c] sm:$0xf]
    %v366 = vld [vmem:[%s353 + $0x30] sm:$0xf]
    %v367 = vld [vmem:[%s353 + $0x34] sm:$0xf]
    %v368 = vld [vmem:[%s353 + $0x38] sm:$0xf]
    %v369 = vld [vmem:[%s353 + $0x3c] sm:$0xf]
    %v370 = vperm.slane %v81, 3
    %v387 = vunpack.c.l.b16 %v354
    %v388 = vunpack.c.l.b16 %v355
    %v389 = vunpack.c.l.b16 %v356
    %v390 = vunpack.c.l.b16 %v357
    %v391 = vunpack.c.l.b16 %v358
    %v392 = vunpack.c.l.b16 %v359
    %v393 = vunpack.c.l.b16 %v360
    %v394 = vunpack.c.l.b16 %v361
    %v395 = vunpack.c.l.b16 %v362
    %v396 = vunpack.c.l.b16 %v363
    %v397 = vunpack.c.l.b16 %v364
    %v398 = vunpack.c.l.b16 %v365
    %v399 = vunpack.c.l.b16 %v366
    %v400 = vunpack.c.l.b16 %v367
    %v401 = vunpack.c.l.b16 %v368
    %v402 = vunpack.c.l.b16 %v369
    %v403 = vpack.c.b16 %v388, %v387
    %v404 = vpack.c.b16 %v390, %v389
    %v405 = vpack.c.b16 %v392, %v391
    %v406 = vpack.c.b16 %v394, %v393
    %v407 = vpack.c.b16 %v396, %v395
    %v408 = vpack.c.b16 %v398, %v397
    %v409 = vpack.c.b16 %v400, %v399
    %v410 = vpack.c.b16 %v402, %v401
    %419 = vmatpush.bf16.msra.mxu0 %v410
    %420 = vmatpush.bf16.msra.mxu0 %v409
    %421 = vmatpush.bf16.msra.mxu0 %v408
    %422 = vmatpush.bf16.msra.mxu0 %v407
    %423 = vmatpush.bf16.msra.mxu0 %v406
    %424 = vmatpush.bf16.msra.mxu0 %v405
    %425 = vmatpush.bf16.msra.mxu0 %v404
    %426 = vmatpush.bf16.msra.mxu0 %v403
    %427 = vmatmul.bf16.gmra.mxu0 %v352
    %v428 = vpop.f32.mrf.mxu0
    %v429 = vadd.f32 %v370, %v428
    %v430 = vpop.f32.mrf.mxu0
    %431 = vdwg.mxu0
    %432 = vadd.xlane.f32.xlu0 %v429
    %v433 = vpop.xlane.xlu0 %432
    %v434 = vmul.f32 %v433, 0.03125
    %v435 = vsub.f32 %v429, %v434
    %v436 = vmul.f32 %v435, %v114
    %v437 = vmul.f32 %v436, %v436
    %438 = vadd.xlane.f32.xlu0 %v437
    %v439 = vpop.xlane.xlu0 %438
    %v440 = vmul.f32 %v439, 0.03125
    %v441 = vadd.f32 %v440, 1e-05
    %v442 = vrsqrt.pop %v441
    %v443 = vmul.f32 %v442, %v441
    %v444 = vmul.f32 %v443, %v442
    %v445 = vmul.f32 0.5, %v444
    %v446 = vsub.f32 1.5, %v445
    %v447 = vmul.f32 %v442, %v446
    %vm448 = vweird.f32 %v441
    %vm449 = vweird.f32 %v442
    %vm450 = vmor %vm448, %vm449
    %v451 = vsel %vm450, %v442, %v447
    %v452 = vmul.f32 %v436, %v451
    %v453 = vperm.slane %v82, 0
    %v454 = vmul.f32 %v452, %v453
    %v455 = vperm.slane %v82, 4
    %v456 = vadd.f32 %v454, %v455
    %v457 = vmul.f32 %v456, 0.01
    %v458 = vmax.f32 %v456, %v457
    %v459 = vpack.c.bf16 %v458, %v458
    %s460 = scalar_lea.vmem [#allocation7], 192
    %v461 = vld [vmem:[%s460] sm:$0xf]
    %v462 = vld [vmem:[%s460 + $0x4] sm:$0xf]
    %v463 = vld [vmem:[%s460 + $0x8] sm:$0xf]
    %v464 = vld [vmem:[%s460 + $0xc] sm:$0xf]
    %v465 = vld [vmem:[%s460 + $0x10] sm:$0xf]
    %v466 = vld [vmem:[%s460 + $0x14] sm:$0xf]
    %v467 = vld [vmem:[%s460 + $0x18] sm:$0xf]
    %v468 = vld [vmem:[%s460 + $0x1c] sm:$0xf]
    %v469 = vld [vmem:[%s460 + $0x20] sm:$0xf]
    %v470 = vld [vmem:[%s460 + $0x24] sm:$0xf]
    %v471 = vld [vmem:[%s460 + $0x28] sm:$0xf]
    %v472 = vld [vmem:[%s460 + $0x2c] sm:$0xf]
    %v473 = vld [vmem:[%s460 + $0x30] sm:$0xf]
    %v474 = vld [vmem:[%s460 + $0x34] sm:$0xf]
    %v475 = vld [vmem:[%s460 + $0x38] sm:$0xf]
    %v476 = vld [vmem:[%s460 + $0x3c] sm:$0xf]
    %v477 = vperm.slane %v81, 4
    %v494 = vunpack.c.l.b16 %v461
    %v495 = vunpack.c.l.b16 %v462
    %v496 = vunpack.c.l.b16 %v463
    %v497 = vunpack.c.l.b16 %v464
    %v498 = vunpack.c.l.b16 %v465
    %v499 = vunpack.c.l.b16 %v466
    %v500 = vunpack.c.l.b16 %v467
    %v501 = vunpack.c.l.b16 %v468
    %v502 = vunpack.c.l.b16 %v469
    %v503 = vunpack.c.l.b16 %v470
    %v504 = vunpack.c.l.b16 %v471
    %v505 = vunpack.c.l.b16 %v472
    %v506 = vunpack.c.l.b16 %v473
    %v507 = vunpack.c.l.b16 %v474
    %v508 = vunpack.c.l.b16 %v475
    %v509 = vunpack.c.l.b16 %v476
    %v510 = vpack.c.b16 %v495, %v494
    %v511 = vpack.c.b16 %v497, %v496
    %v512 = vpack.c.b16 %v499, %v498
    %v513 = vpack.c.b16 %v501, %v500
    %v514 = vpack.c.b16 %v503, %v502
    %v515 = vpack.c.b16 %v505, %v504
    %v516 = vpack.c.b16 %v507, %v506
    %v517 = vpack.c.b16 %v509, %v508
    %526 = vmatpush.bf16.msra.mxu0 %v517
    %527 = vmatpush.bf16.msra.mxu0 %v516
    %528 = vmatpush.bf16.msra.mxu0 %v515
    %529 = vmatpush.bf16.msra.mxu0 %v514
    %530 = vmatpush.bf16.msra.mxu0 %v513
    %531 = vmatpush.bf16.msra.mxu0 %v512
    %532 = vmatpush.bf16.msra.mxu0 %v511
    %533 = vmatpush.bf16.msra.mxu0 %v510
    %534 = vmatmul.bf16.gmra.mxu0 %v459
    %v535 = vpop.f32.mrf.mxu0
    %v536 = vadd.f32 %v477, %v535
    %v537 = vpop.f32.mrf.mxu0
    %538 = vdwg.mxu0
    %vm539 = vcmask 64512
    %540 = vst.msk [vmem:[#allocation10] sm:$0xff] %vm539, %v536
    // Predicated region
    $region34: #{tpu_custom_call.1} parent=1 // pred_check
      _
    $region35: #{tpu_custom_call.1} parent=1 // pred_check_branch
      %542 = sbr.rel (0) target = $region37
    $region36: #{tpu_custom_call.1} parent=1 // pred_region
      %544 = vsyncadd [#allocation4], 0
      %s546 = sshll.u32 [#allocation10], 4
      %s547 = int_to_ptr.vmem [resolvable:$true] %s546
      %s548 = sshll.u32 %s4, 4
      %s549 = int_to_ptr.hbm [resolvable:$true] %s548
      %551 = dma.vmem_to_hbm [thread:$0]  %s547, 128, %s549, [#allocation4]
    $region37: #{tpu_custom_call.1} parent=1 // pred_fallthru
      _
    // Predicated region
    $region38: #{tpu_custom_call.1} parent=1 // pred_check
      _
    $region39: #{tpu_custom_call.1} parent=1 // pred_check_branch
      %553 = sbr.rel (0) target = $region41
    $region40: #{tpu_custom_call.1} parent=1 // pred_region
      %555 = dma.done [#allocation4], 128
    $region41: #{tpu_custom_call.1} parent=1 // pred_fallthru
      _
    %556 = vsyncpa [#allocation3], 1
    %557 = vsyncpa [#allocation6], 1
    %558 = vsyncpa [#allocation9], 1
    %559 = vsyncpa [#allocation4], 1

</llo_original>
